<compile_context>
chip_gen: v6e
topology: v6e:2x2x1
jax: 0.10.0
libtpu: 0.0.40
codegen_flags: <defaults>
</compile_context>

<pallas_src>
import jax
import jax.numpy as jnp
from jax.experimental import pallas as pl
from jax.experimental.pallas import tpu as pltpu

HIDDEN = 128
OUT = 2
OUT_PAD = 8          # small zero-padded output width (full-last-dim block, cheap writeback)
TILE_CAP = 2048      # per-step VMEM at this cap is only a few MiB -> fits every generation


def mlp_kernel(x_ref, w1_ref, b1_ref, w2_ref, b2_ref, w3_ref, b3_ref, o_ref):
    # layer1: Linear(1, 128) + ReLU. K=1 contraction == outer product, so run it
    # on the VPU as a lane-broadcast multiply (XLU/bcast slot) instead of a
    # degenerate MXU issue. Kept in f32 (v5e has no bf16 VALU).
    h1 = jnp.maximum(x_ref[...] * w1_ref[...] + b1_ref[...], 0.0)          # (bt, 128) f32
    # layer2: Linear(128, 128) + ReLU. bf16 operands into the MXU, f32 accumulate.
    h2 = jnp.dot(h1.astype(jnp.bfloat16), w2_ref[...],
                 preferred_element_type=jnp.float32) + b2_ref[...]
    h2 = jnp.maximum(h2, 0.0)
    # layer3: Linear(128, 2) computed into an 8-wide zero-padded slab; columns
    # OUT..7 of w3/b3 are zero, so those lanes are pure padding.
    o_ref[...] = jnp.dot(h2.astype(jnp.bfloat16), w3_ref[...],
                         preferred_element_type=jnp.float32) + b3_ref[...]


def prepare_params(params):
    """Pad layer-3 weight/bias to OUT_PAD columns and cast matmul weights to bf16. Do once."""
    w1, b1, w2, b2, w3, b3 = params
    w3p = jnp.zeros((HIDDEN, OUT_PAD), jnp.float32).at[:, :OUT].set(w3)
    b3p = jnp.zeros((1, OUT_PAD), jnp.float32).at[:, :OUT].set(b3)
    return (w1.astype(jnp.float32), b1.astype(jnp.float32),
            w2.astype(jnp.bfloat16), b2.astype(jnp.float32),
            w3p.astype(jnp.bfloat16), b3p)


def _num_tensorcores():
    """Best-effort: 2 TensorCores per chip on v7x, 1 on v5e/v6e. Safe fallback = 1."""
    try:
        kind = jax.devices()[0].device_kind.lower()
    except Exception:
        return 1
    return 2 if "7" in kind else 1


def _choose_bt(B, num_tc):
    if num_tc >= 2 and B >= 256:
        # Guarantee >= 2 grid steps on the parallel axis so both TCs get work.
        bt = min(TILE_CAP, pl.cdiv(B, 2))
        return ((bt + 7) // 8) * 8          # keep tiled blocks 8-row aligned
    if B <= TILE_CAP:
        return B                            # single block: zero pipeline overhead
    return TILE_CAP


def net_forward(x, padded_params, *, bt=None):
    """x: (B, 1) float32 -> action: (B, 2) float32."""
    w1, b1, w2, b2, w3p, b3p = padded_params
    B = x.shape[0]
    if bt is None:
        bt = _choose_bt(B, _num_tensorcores())

    # Zero-pad the batch so it is a whole number of tiles (padding rows are
    # discarded after the call); no-op when bt == B.
    n_steps = pl.cdiv(B, bt)
    B_pad = n_steps * bt
    x_in = x if B_pad == B else jnp.pad(x, ((0, B_pad - B), (0, 0)))

    # Advisory cost estimate: two bf16 matmuls per row + the VPU layer 1.
    flops = 2 * B_pad * (HIDDEN * HIDDEN + HIDDEN * OUT_PAD) + 3 * B_pad * HIDDEN
    bytes_accessed = (4 * (B_pad * 1 + B_pad * OUT_PAD + 2 * HIDDEN + OUT_PAD)
                      + 2 * (HIDDEN * HIDDEN + HIDDEN * OUT_PAD))

    # Per-step VMEM is tiny at the 2048-row cap; only widen the scoped limit if
    # a caller forces a much larger tile (v5e default scoped VMEM is 16 MiB).
    cp_kwargs = dict(dimension_semantics=("parallel",))
    if bt > 4096:
        cp_kwargs["vmem_limit_bytes"] = 48 * 1024 * 1024

    out = pl.pallas_call(
        mlp_kernel,
        out_shape=jax.ShapeDtypeStruct((B_pad, OUT_PAD), jnp.float32),
        grid=(n_steps,),
        in_specs=[
            # x: tile over the batch axis; last dim (1) equals the full array dim.
            pl.BlockSpec((bt, 1), lambda i: (i, 0)),
            # parameters: full-array blocks, resident across all grid steps.
            pl.BlockSpec((1, HIDDEN), lambda i: (0, 0)),
            pl.BlockSpec((1, HIDDEN), lambda i: (0, 0)),
            pl.BlockSpec((HIDDEN, HIDDEN), lambda i: (0, 0)),
            pl.BlockSpec((1, HIDDEN), lambda i: (0, 0)),
            pl.BlockSpec((HIDDEN, OUT_PAD), lambda i: (0, 0)),
            pl.BlockSpec((1, OUT_PAD), lambda i: (0, 0)),
        ],
        out_specs=pl.BlockSpec((bt, OUT_PAD), lambda i: (i, 0)),
        compiler_params=pltpu.CompilerParams(**cp_kwargs),
        cost_estimate=pl.CostEstimate(
            flops=flops, transcendentals=0, bytes_accessed=bytes_accessed
        ),
    )(x_in, w1, b1, w2, b2, w3p, b3p)
    # Drop padding rows and the zero-padded lanes -> the true (B, 2) action.
    return out[:B, :OUT]


def init_params(key):
    """Deterministic init mirroring nn.Linear default (U[-1/sqrt(fan_in), 1/sqrt(fan_in)])."""
    ks = jax.random.split(key, 6)

    def uniform(k, shape, fan_in):
        bound = 1.0 / jnp.sqrt(jnp.float32(fan_in))
        return jax.random.uniform(k, shape, jnp.float32, -bound, bound)

    w1 = uniform(ks[0], (1, HIDDEN), 1)
    b1 = uniform(ks[1], (1, HIDDEN), 1)
    w2 = uniform(ks[2], (HIDDEN, HIDDEN), HIDDEN)
    b2 = uniform(ks[3], (1, HIDDEN), HIDDEN)
    w3 = uniform(ks[4], (HIDDEN, OUT), HIDDEN)
    b3 = uniform(ks[5], (1, OUT), HIDDEN)
    return (w1, b1, w2, b2, w3, b3)


def net_forward_ref(x, params):
    w1, b1, w2, b2, w3, b3 = params
    h1 = jnp.maximum(x @ w1 + b1, 0.0)
    h2 = jnp.maximum(h1 @ w2 + b2, 0.0)
    return h2 @ w3 + b3


if __name__ == "__main__":
    key = jax.random.PRNGKey(0)
    k_param, k_x1, k_x2 = jax.random.split(key, 3)
    params = init_params(k_param)
    padded = prepare_params(params)

    # bf16 MXU operands with f32 accumulation -> relax tolerance vs. the f32 ref.
    TOL = 2e-2

    # Small batch: single-block path (grid=(1,) on 1-TC chips; >=2 steps on v7x
    # only kicks in at B >= 256).
    B_small = 16
    x_small = jax.random.normal(k_x1, (B_small, 1), jnp.float32)
    out_small = jax.block_until_ready(net_forward(x_small, padded))
    ref_small = net_forward_ref(x_small, params)
    assert out_small.shape == (B_small, OUT)
    assert jnp.allclose(out_small, ref_small, atol=TOL, rtol=TOL)

    # Ragged batch: exercises the zero-pad + slice path.
    B_ragged = 100
    x_ragged = jax.random.normal(k_x2, (B_ragged, 1), jnp.float32)
    out_ragged = jax.block_until_ready(net_forward(x_ragged, padded, bt=48))
    ref_ragged = net_forward_ref(x_ragged, params)
    assert out_ragged.shape == (B_ragged, OUT)
    assert jnp.allclose(out_ragged, ref_ragged, atol=TOL, rtol=TOL)

    print("KERNEL_OK")
</pallas_src>

<mosaic_0001>
module attributes {stable_mosaic.version = 11 : i64} {
  func.func @mlp_kernel(%arg0: i32, %arg1: memref<16x1xf32, #tpu.memory_space<vmem>>, %arg2: memref<1x128xf32, #tpu.memory_space<vmem>>, %arg3: memref<1x128xf32, #tpu.memory_space<vmem>>, %arg4: memref<128x128xbf16, #tpu.memory_space<vmem>>, %arg5: memref<1x128xf32, #tpu.memory_space<vmem>>, %arg6: memref<128x8xbf16, #tpu.memory_space<vmem>>, %arg7: memref<1x8xf32, #tpu.memory_space<vmem>>, %arg8: memref<16x8xf32, #tpu.memory_space<vmem>>) attributes {dimension_semantics = [#tpu.dimension_semantics<parallel>], iteration_bounds = array<i64: 1>, scalar_prefetch = 0 : i64, scratch_operands = 0 : i64, tpu.core_type = #tpu.core_type<tc>, window_params = [{transform_indices = @transform_0, window_bounds = array<i64: 16, 1>}, {pipeline_mode = #tpu.pipeline_mode<synchronous>, transform_indices = @transform_1, window_bounds = array<i64: 1, 128>}, {pipeline_mode = #tpu.pipeline_mode<synchronous>, transform_indices = @transform_2, window_bounds = array<i64: 1, 128>}, {pipeline_mode = #tpu.pipeline_mode<synchronous>, transform_indices = @transform_3, window_bounds = array<i64: 128, 128>}, {pipeline_mode = #tpu.pipeline_mode<synchronous>, transform_indices = @transform_4, window_bounds = array<i64: 1, 128>}, {pipeline_mode = #tpu.pipeline_mode<synchronous>, transform_indices = @transform_5, window_bounds = array<i64: 128, 8>}, {pipeline_mode = #tpu.pipeline_mode<synchronous>, transform_indices = @transform_6, window_bounds = array<i64: 1, 8>}, {transform_indices = @transform_7, window_bounds = array<i64: 16, 8>}]} {
    %c0 = arith.constant 0 : index
    %c0_0 = arith.constant 0 : index
    %0 = vector.load %arg1[%c0, %c0_0] : memref<16x1xf32, #tpu.memory_space<vmem>>, vector<16x1xf32>
    %c0_1 = arith.constant 0 : index
    %c0_2 = arith.constant 0 : index
    %1 = vector.load %arg2[%c0_1, %c0_2] : memref<1x128xf32, #tpu.memory_space<vmem>>, vector<1x128xf32>
    %2 = vector.broadcast %0 : vector<16x1xf32> to vector<16x128xf32>
    %3 = vector.broadcast %1 : vector<1x128xf32> to vector<16x128xf32>
    %4 = arith.mulf %2, %3 : vector<16x128xf32>
    %c0_3 = arith.constant 0 : index
    %c0_4 = arith.constant 0 : index
    %5 = vector.load %arg3[%c0_3, %c0_4] : memref<1x128xf32, #tpu.memory_space<vmem>>, vector<1x128xf32>
    %6 = vector.broadcast %5 : vector<1x128xf32> to vector<16x128xf32>
    %7 = arith.addf %4, %6 : vector<16x128xf32>
    %cst = arith.constant 0.000000e+00 : f32
    %8 = vector.broadcast %cst : f32 to vector<16x128xf32>
    %9 = arith.maximumf %7, %8 : vector<16x128xf32>
    %10 = arith.truncf %9 : vector<16x128xf32> to vector<16x128xbf16>
    %c0_5 = arith.constant 0 : index
    %c0_6 = arith.constant 0 : index
    %11 = vector.load %arg4[%c0_5, %c0_6] : memref<128x128xbf16, #tpu.memory_space<vmem>>, vector<128x128xbf16>
    %cst_7 = arith.constant dense<0.000000e+00> : vector<16x128xf32>
    %12 = tpu.matmul %10, %11, %cst_7 {dimension_numbers = #tpu.dot_dimension_numbers<[1], [0], [0], [1], [0, 0, 1, 1], [], []>} : vector<16x128xbf16>, vector<128x128xbf16>, vector<16x128xf32> -> vector<16x128xf32>
    %c0_8 = arith.constant 0 : index
    %c0_9 = arith.constant 0 : index
    %13 = vector.load %arg5[%c0_8, %c0_9] : memref<1x128xf32, #tpu.memory_space<vmem>>, vector<1x128xf32>
    %14 = vector.broadcast %13 : vector<1x128xf32> to vector<16x128xf32>
    %15 = arith.addf %12, %14 : vector<16x128xf32>
    %cst_10 = arith.constant 0.000000e+00 : f32
    %16 = vector.broadcast %cst_10 : f32 to vector<16x128xf32>
    %17 = arith.maximumf %15, %16 : vector<16x128xf32>
    %18 = arith.truncf %17 : vector<16x128xf32> to vector<16x128xbf16>
    %c0_11 = arith.constant 0 : index
    %c0_12 = arith.constant 0 : index
    %19 = vector.load %arg6[%c0_11, %c0_12] : memref<128x8xbf16, #tpu.memory_space<vmem>>, vector<128x8xbf16>
    %cst_13 = arith.constant dense<0.000000e+00> : vector<16x8xf32>
    %20 = tpu.matmul %18, %19, %cst_13 {dimension_numbers = #tpu.dot_dimension_numbers<[1], [0], [0], [1], [0, 0, 1, 1], [], []>} : vector<16x128xbf16>, vector<128x8xbf16>, vector<16x8xf32> -> vector<16x8xf32>
    %c0_14 = arith.constant 0 : index
    %c0_15 = arith.constant 0 : index
    %21 = vector.load %arg7[%c0_14, %c0_15] : memref<1x8xf32, #tpu.memory_space<vmem>>, vector<1x8xf32>
    %22 = vector.broadcast %21 : vector<1x8xf32> to vector<16x8xf32>
    %23 = arith.addf %20, %22 : vector<16x8xf32>
    %c0_16 = arith.constant 0 : index
    %c0_17 = arith.constant 0 : index
    %24 = vector.load %arg8[%c0_16, %c0_17] : memref<16x8xf32, #tpu.memory_space<vmem>>, vector<16x8xf32>
    tpu.vector_store %arg8[%c0_16, %c0_17], %23 {strides = array<i32>} : memref<16x8xf32, #tpu.memory_space<vmem>>, vector<16x8xf32>,
    return
  }
  func.func @transform_0(%arg0: i32) -> (i32, i32) {
    %c0_i32 = arith.constant 0 : i32
    %c0_i32_0 = arith.constant 0 : i32
    return %arg0, %c0_i32 : i32, i32
  }
  func.func @transform_1(%arg0: i32) -> (i32, i32) {
    %c0_i32 = arith.constant 0 : i32
    %c0_i32_0 = arith.constant 0 : i32
    %c0_i32_1 = arith.constant 0 : i32
    return %c0_i32, %c0_i32_0 : i32, i32
  }
  func.func @transform_2(%arg0: i32) -> (i32, i32) {
    %c0_i32 = arith.constant 0 : i32
    %c0_i32_0 = arith.constant 0 : i32
    %c0_i32_1 = arith.constant 0 : i32
    return %c0_i32, %c0_i32_0 : i32, i32
  }
  func.func @transform_3(%arg0: i32) -> (i32, i32) {
    %c0_i32 = arith.constant 0 : i32
    %c0_i32_0 = arith.constant 0 : i32
    %c0_i32_1 = arith.constant 0 : i32
    return %c0_i32, %c0_i32_0 : i32, i32
  }
  func.func @transform_4(%arg0: i32) -> (i32, i32) {
    %c0_i32 = arith.constant 0 : i32
    %c0_i32_0 = arith.constant 0 : i32
    %c0_i32_1 = arith.constant 0 : i32
    return %c0_i32, %c0_i32_0 : i32, i32
  }
  func.func @transform_5(%arg0: i32) -> (i32, i32) {
    %c0_i32 = arith.constant 0 : i32
    %c0_i32_0 = arith.constant 0 : i32
    %c0_i32_1 = arith.constant 0 : i32
    return %c0_i32, %c0_i32_0 : i32, i32
  }
  func.func @transform_6(%arg0: i32) -> (i32, i32) {
    %c0_i32 = arith.constant 0 : i32
    %c0_i32_0 = arith.constant 0 : i32
    %c0_i32_1 = arith.constant 0 : i32
    return %c0_i32, %c0_i32_0 : i32, i32
  }
  func.func @transform_7(%arg0: i32) -> (i32, i32) {
    %c0_i32 = arith.constant 0 : i32
    %c0_i32_0 = arith.constant 0 : i32
    return %arg0, %c0_i32 : i32, i32
  }
}

</mosaic_0001>

<llo_original>
// kernel: tpu_custom_call.1
$region0: #{tpu_custom_call.1}
  #allocation0 [shape = 'u32[]', space=smem, size = 0x4, offset = 0x4, fixed_abs, tag = 'smem constant byte address 0x4 - core index']
  #allocation1 [shape = 'u32[144,128]{1,0:T(1,128)}', space=vmem, size = 0x12000, scoped, tag = 'internal scratch']
  %s0 = inlined_call_operand.vmem [shape: f32[16,1], index: 0, kind: input, shape index: {}]
  %s1 = inlined_call_operand.vmem [shape: f32[1,128], index: 1, kind: input, shape index: {}]
  %s2 = inlined_call_operand.vmem [shape: f32[1,128], index: 2, kind: input, shape index: {}]
  %s3 = inlined_call_operand.vmem [shape: bf16[128,128], index: 3, kind: input, shape index: {}]
  %s4 = inlined_call_operand.vmem [shape: f32[1,128], index: 4, kind: input, shape index: {}]
  %s5 = inlined_call_operand.vmem [shape: bf16[128,8], index: 5, kind: input, shape index: {}]
  %s6 = inlined_call_operand.vmem [shape: f32[1,8], index: 6, kind: input, shape index: {}]
  %s7 = inlined_call_operand.vmem [shape: f32[16,8], index: 7, kind: output, shape index: {}]
  %s8 = sld [smem:[#allocation0]]
  $region38: #{tpu_custom_call.1} parent=0
    _
  %s10 = ssub.s32 1, %s8
  %s11 = scalar_select 0, %s10, %s8
  // Predicated region
  $region2: #{tpu_custom_call.1} parent=0 // pred_check
    _
  $region3: #{tpu_custom_call.1} parent=0 // pred_check_branch
    %13 = sbr.rel (0) target = $region5
  $region4: #{tpu_custom_call.1} parent=0 // pred_region
    _
  $region5: #{tpu_custom_call.1} parent=0 // pred_fallthru
    _
  // Predicated region
  $region6: #{tpu_custom_call.1} parent=0 // pred_check
    _
  $region7: #{tpu_custom_call.1} parent=0 // pred_check_branch
    %15 = sbr.rel (0) target = $region9
  $region8: #{tpu_custom_call.1} parent=0 // pred_region
    _
  $region9: #{tpu_custom_call.1} parent=0 // pred_fallthru
    _
  // Predicated region
  $region10: #{tpu_custom_call.1} parent=0 // pred_check
    _
  $region11: #{tpu_custom_call.1} parent=0 // pred_check_branch
    %17 = sbr.rel (0) target = $region13
  $region12: #{tpu_custom_call.1} parent=0 // pred_region
    _
  $region13: #{tpu_custom_call.1} parent=0 // pred_fallthru
    _
  // Predicated region
  $region14: #{tpu_custom_call.1} parent=0 // pred_check
    _
  $region15: #{tpu_custom_call.1} parent=0 // pred_check_branch
    %19 = sbr.rel (0) target = $region17
  $region16: #{tpu_custom_call.1} parent=0 // pred_region
    _
  $region17: #{tpu_custom_call.1} parent=0 // pred_fallthru
    _
  // Predicated region
  $region18: #{tpu_custom_call.1} parent=0 // pred_check
    _
  $region19: #{tpu_custom_call.1} parent=0 // pred_check_branch
    %21 = sbr.rel (0) target = $region21
  $region20: #{tpu_custom_call.1} parent=0 // pred_region
    _
  $region21: #{tpu_custom_call.1} parent=0 // pred_fallthru
    _
  // Predicated region
  $region22: #{tpu_custom_call.1} parent=0 // pred_check
    _
  $region23: #{tpu_custom_call.1} parent=0 // pred_check_branch
    %23 = sbr.rel (0) target = $region25
  $region24: #{tpu_custom_call.1} parent=0 // pred_region
    _
  $region25: #{tpu_custom_call.1} parent=0 // pred_fallthru
    _
  // Predicated region
  $region26: #{tpu_custom_call.1} parent=0 // pred_check
    _
  $region27: #{tpu_custom_call.1} parent=0 // pred_check_branch
    %25 = sbr.rel (0) target = $region29
  $region28: #{tpu_custom_call.1} parent=0 // pred_region
    _
  $region29: #{tpu_custom_call.1} parent=0 // pred_fallthru
    _
  %v27 = vld [vmem:[%s0] sm:$0xff]
  %v28 = vld [vmem:[%s0 + $0x8] sm:$0xff]
  %v29 = vld [vmem:[%s1] sm:$0x1]
  %31 = vset.pattern.permute.xlu0 0
  %32 = vperm.xlu0 %31, %v27
  %v33 = vpop.permute.xlu0 %32
  %36 = vset.pattern.permute.xlu0 0
  %37 = vperm.xlu0 %36, %v28
  %v38 = vpop.permute.xlu0 %37
  %v41 = vlaneseq
  %v42 = vshrl.u32 %v41, 7
  %v43 = vsub.s32 0, %v42
  %v44 = vrot.slane %v29, %v43
  %v46 = vmul.f32 %v33, %v44
  %v47 = vmul.f32 %v38, %v44
  %v48 = vld [vmem:[%s2] sm:$0x1]
  %v50 = vlaneseq
  %v51 = vshrl.u32 %v50, 7
  %v52 = vsub.s32 0, %v51
  %v53 = vrot.slane %v48, %v52
  %v55 = vadd.f32 %v46, %v53
  %v56 = vadd.f32 %v47, %v53
  %v57 = vmax.f32 %v55, 0.0
  %v58 = vmax.f32 %v56, 0.0
  %v59 = vpack.c.bf16 %v58, %v57
  %v60 = vld [vmem:[%s3] sm:$0xf]
  %v61 = vld [vmem:[%s3 + $0x4] sm:$0xf]
  %v62 = vld [vmem:[%s3 + $0x8] sm:$0xf]
  %v63 = vld [vmem:[%s3 + $0xc] sm:$0xf]
  %v64 = vld [vmem:[%s3 + $0x10] sm:$0xf]
  %v65 = vld [vmem:[%s3 + $0x14] sm:$0xf]
  %v66 = vld [vmem:[%s3 + $0x18] sm:$0xf]
  %v67 = vld [vmem:[%s3 + $0x1c] sm:$0xf]
  %v68 = vld [vmem:[%s3 + $0x20] sm:$0xf]
  %v69 = vld [vmem:[%s3 + $0x24] sm:$0xf]
  %v70 = vld [vmem:[%s3 + $0x28] sm:$0xf]
  %v71 = vld [vmem:[%s3 + $0x2c] sm:$0xf]
  %v72 = vld [vmem:[%s3 + $0x30] sm:$0xf]
  %v73 = vld [vmem:[%s3 + $0x34] sm:$0xf]
  %v74 = vld [vmem:[%s3 + $0x38] sm:$0xf]
  %v75 = vld [vmem:[%s3 + $0x3c] sm:$0xf]
  %v76 = vld [vmem:[%s4] sm:$0x1]
  %v78 = vlaneseq
  %v79 = vshrl.u32 %v78, 7
  %v80 = vsub.s32 0, %v79
  %v81 = vrot.slane %v76, %v80
  %v99 = vunpack.c.l.b16 %v60
  %v100 = vunpack.c.l.b16 %v61
  %v101 = vunpack.c.l.b16 %v62
  %v102 = vunpack.c.l.b16 %v63
  %v103 = vunpack.c.l.b16 %v64
  %v104 = vunpack.c.l.b16 %v65
  %v105 = vunpack.c.l.b16 %v66
  %v106 = vunpack.c.l.b16 %v67
  %v107 = vunpack.c.l.b16 %v68
  %v108 = vunpack.c.l.b16 %v69
  %v109 = vunpack.c.l.b16 %v70
  %v110 = vunpack.c.l.b16 %v71
  %v111 = vunpack.c.l.b16 %v72
  %v112 = vunpack.c.l.b16 %v73
  %v113 = vunpack.c.l.b16 %v74
  %v114 = vunpack.c.l.b16 %v75
  %v115 = vpack.c.b16 %v100, %v99
  %v116 = vpack.c.b16 %v102, %v101
  %v117 = vpack.c.b16 %v104, %v103
  %v118 = vpack.c.b16 %v106, %v105
  %v119 = vpack.c.b16 %v108, %v107
  %v120 = vpack.c.b16 %v110, %v109
  %v121 = vpack.c.b16 %v112, %v111
  %v122 = vpack.c.b16 %v114, %v113
  %131 = vmatprep.subr.bf16.mxu0 0
  %132 = vmatpush1.bf16.msra.mxu0 %v122
  %133 = vmatprep.subr.bf16.mxu0 0
  %134 = vmatpush1.bf16.msra.mxu0 %v121
  %135 = vmatprep.subr.bf16.mxu0 0
  %136 = vmatpush1.bf16.msra.mxu0 %v120
  %137 = vmatprep.subr.bf16.mxu0 0
  %138 = vmatpush1.bf16.msra.mxu0 %v119
  %139 = vmatprep.subr.bf16.mxu0 0
  %140 = vmatpush1.bf16.msra.mxu0 %v118
  %141 = vmatprep.subr.bf16.mxu0 0
  %142 = vmatpush1.bf16.msra.mxu0 %v117
  %143 = vmatprep.subr.bf16.mxu0 0
  %144 = vmatpush1.bf16.msra.mxu0 %v116
  %145 = vmatprep.subr.bf16.mxu0 0
  %146 = vmatpush1.bf16.msra.mxu0 %v115
  %147 = vmatprep.subr.bf16.mxu0 0
  %148 = vmatpush2.bf16.msra.mxu0 0
  %149 = vmatprep.subr.bf16.mxu0 0
  %150 = vmatpush2.bf16.msra.mxu0 0
  %151 = vmatprep.subr.bf16.mxu0 0
  %152 = vmatpush2.bf16.msra.mxu0 0
  %153 = vmatprep.subr.bf16.mxu0 0
  %154 = vmatpush2.bf16.msra.mxu0 0
  %155 = vmatprep.subr.bf16.mxu0 0
  %156 = vmatpush2.bf16.msra.mxu0 0
  %157 = vmatprep.subr.bf16.mxu0 0
  %158 = vmatpush2.bf16.msra.mxu0 0
  %159 = vmatprep.subr.bf16.mxu0 0
  %160 = vmatpush2.bf16.msra.mxu0 0
  %161 = vmatprep.subr.bf16.mxu0 0
  %162 = vmatpush2.bf16.msra.mxu0 0
  %163 = vmatprep.mubr.bf16.mxu0 0
  %164 = vmatmul.mubr.bf16.gmra.mxu0 %v59
  %v165 = vpop.f32.mrf.mxu0
  %v166 = vadd.f32 %v81, %v165
  %v167 = vpop.f32.mrf.mxu0
  %v168 = vpop.f32.mrf.mxu0
  %v169 = vadd.f32 %v81, %v168
  %v170 = vpop.f32.mrf.mxu0
  %171 = vdwg.mxu0
  %v172 = vmax.f32 %v166, 0.0
  %v173 = vmax.f32 %v169, 0.0
  %v174 = vpack.c.bf16 %v173, %v172
  %v175 = vld [vmem:[%s5] sm:$0xf]
  %v176 = vld [vmem:[%s5 + $0x4] sm:$0xf]
  %v177 = vld [vmem:[%s5 + $0x8] sm:$0xf]
  %v178 = vld [vmem:[%s5 + $0xc] sm:$0xf]
  %v179 = vld [vmem:[%s5 + $0x10] sm:$0xf]
  %v180 = vld [vmem:[%s5 + $0x14] sm:$0xf]
  %v181 = vld [vmem:[%s5 + $0x18] sm:$0xf]
  %v182 = vld [vmem:[%s5 + $0x1c] sm:$0xf]
  %v183 = vld [vmem:[%s5 + $0x20] sm:$0xf]
  %v184 = vld [vmem:[%s5 + $0x24] sm:$0xf]
  %v185 = vld [vmem:[%s5 + $0x28] sm:$0xf]
  %v186 = vld [vmem:[%s5 + $0x2c] sm:$0xf]
  %v187 = vld [vmem:[%s5 + $0x30] sm:$0xf]
  %v188 = vld [vmem:[%s5 + $0x34] sm:$0xf]
  %v189 = vld [vmem:[%s5 + $0x38] sm:$0xf]
  %v190 = vld [vmem:[%s5 + $0x3c] sm:$0xf]
  %v191 = vld [vmem:[%s6] sm:$0x1]
  %v193 = vlaneseq
  %v194 = vshrl.u32 %v193, 7
  %v195 = vsub.s32 0, %v194
  %v196 = vrot.slane %v191, %v195
  %v214 = vunpack.c.l.b16 %v175
  %v215 = vunpack.c.l.b16 %v176
  %v216 = vunpack.c.l.b16 %v177
  %v217 = vunpack.c.l.b16 %v178
  %v218 = vunpack.c.l.b16 %v179
  %v219 = vunpack.c.l.b16 %v180
  %v220 = vunpack.c.l.b16 %v181
  %v221 = vunpack.c.l.b16 %v182
  %v222 = vunpack.c.l.b16 %v183
  %v223 = vunpack.c.l.b16 %v184
  %v224 = vunpack.c.l.b16 %v185
  %v225 = vunpack.c.l.b16 %v186
  %v226 = vunpack.c.l.b16 %v187
  %v227 = vunpack.c.l.b16 %v188
  %v228 = vunpack.c.l.b16 %v189
  %v229 = vunpack.c.l.b16 %v190
  %v230 = vpack.c.b16 %v215, %v214
  %v231 = vpack.c.b16 %v217, %v216
  %v232 = vpack.c.b16 %v219, %v218
  %v233 = vpack.c.b16 %v221, %v220
  %v234 = vpack.c.b16 %v223, %v222
  %v235 = vpack.c.b16 %v225, %v224
  %v236 = vpack.c.b16 %v227, %v226
  %v237 = vpack.c.b16 %v229, %v228
  %246 = vmatprep.subr.bf16.mxu0 0
  %247 = vmatpush1.bf16.msra.mxu0 %v237
  %248 = vmatprep.subr.bf16.mxu0 0
  %249 = vmatpush1.bf16.msra.mxu0 %v236
  %250 = vmatprep.subr.bf16.mxu0 0
  %251 = vmatpush1.bf16.msra.mxu0 %v235
  %252 = vmatprep.subr.bf16.mxu0 0
  %253 = vmatpush1.bf16.msra.mxu0 %v234
  %254 = vmatprep.subr.bf16.mxu0 0
  %255 = vmatpush1.bf16.msra.mxu0 %v233
  %256 = vmatprep.subr.bf16.mxu0 0
  %257 = vmatpush1.bf16.msra.mxu0 %v232
  %258 = vmatprep.subr.bf16.mxu0 0
  %259 = vmatpush1.bf16.msra.mxu0 %v231
  %260 = vmatprep.subr.bf16.mxu0 0
  %261 = vmatpush1.bf16.msra.mxu0 %v230
  %262 = vmatprep.subr.bf16.mxu0 0
  %263 = vmatpush2.bf16.msra.mxu0 0
  %264 = vmatprep.subr.bf16.mxu0 0
  %265 = vmatpush2.bf16.msra.mxu0 0
  %266 = vmatprep.subr.bf16.mxu0 0
  %267 = vmatpush2.bf16.msra.mxu0 0
  %268 = vmatprep.subr.bf16.mxu0 0
  %269 = vmatpush2.bf16.msra.mxu0 0
  %270 = vmatprep.subr.bf16.mxu0 0
  %271 = vmatpush2.bf16.msra.mxu0 0
  %272 = vmatprep.subr.bf16.mxu0 0
  %273 = vmatpush2.bf16.msra.mxu0 0
  %274 = vmatprep.subr.bf16.mxu0 0
  %275 = vmatpush2.bf16.msra.mxu0 0
  %276 = vmatprep.subr.bf16.mxu0 0
  %277 = vmatpush2.bf16.msra.mxu0 0
  %278 = vmatprep.mubr.bf16.mxu0 0
  %279 = vmatmul.mubr.bf16.gmra.mxu0 %v174
  %v280 = vpop.f32.mrf.mxu0
  %v281 = vadd.f32 %v196, %v280
  %v282 = vpop.f32.mrf.mxu0
  %v283 = vpop.f32.mrf.mxu0
  %v284 = vadd.f32 %v196, %v283
  %v285 = vpop.f32.mrf.mxu0
  %286 = vdwg.mxu0
  %vm287 = vcmask 64512
  %288 = vst.msk [vmem:[%s7] sm:$0xff] %vm287, %v281
  %289 = vst.msk [vmem:[%s7 + $0x8] sm:$0xff] %vm287, %v284
  // Predicated region
  $region30: #{tpu_custom_call.1} parent=0 // pred_check
    _
  $region31: #{tpu_custom_call.1} parent=0 // pred_check_branch
    %291 = sbr.rel (0) target = $region33
  $region32: #{tpu_custom_call.1} parent=0 // pred_region
    _
  $region33: #{tpu_custom_call.1} parent=0 // pred_fallthru
    _
  // Predicated region
  $region34: #{tpu_custom_call.1} parent=0 // pred_check
    _
  $region35: #{tpu_custom_call.1} parent=0 // pred_check_branch
    %293 = sbr.rel (0) target = $region37
  $region36: #{tpu_custom_call.1} parent=0 // pred_region
    _
  $region37: #{tpu_custom_call.1} parent=0 // pred_fallthru
    _

</llo_original>
